<compile_context>
chip_gen: v7x
topology: tpu7x:2x2x1
jax: 0.10.0
libtpu: 0.0.40
codegen_flags: <defaults>
</compile_context>

<pallas_src>
import functools
import math
from typing import NamedTuple

import jax
import jax.numpy as jnp
from jax.experimental import pallas as pl
from jax.experimental.pallas import tpu as pltpu

LANES = 128


class PackedParams(NamedTuple):
    """Ensemble parameters packed along the 128-lane class axis.

    Student s, class c lives on lane (s // spt)*128 + (s % spt)*seg + c of lane
    tile t = s // spt, where seg = next_pow2(C) and spt = 128 // seg.
    (Note: the int fields are Python ints; keep them static if you jit.)
    """
    w_gc: jax.Array    # [F, T*128] matmul_dtype
    b_gc: jax.Array    # [1, T*128] f32
    w_lin: jax.Array   # [N, T*128] f32 (zero on pad-class lanes)
    b_lin: jax.Array   # [1, T*128] f32
    n_students: int
    n_class: int
    seg: int
    n_tiles: int


# ---------------------------------------------------------------------------
# Kernel
# ---------------------------------------------------------------------------
def _seg_shift(v, pos, k, seg):
    """Circular shift by +k WITHIN each `seg`-wide lane segment.

    result[:, i] = v[:, base(i) + ((i - base(i) + k) % seg)]
    Two whole-axis pltpu.roll's (XLU) + one select (VPU).
    """
    lanes = v.shape[-1]
    down = pltpu.roll(v, shift=lanes - k, axis=1)   # down[i] = v[(i + k) % lanes]
    up = pltpu.roll(v, shift=seg - k, axis=1)       # up[i]   = v[(i + k - seg) % lanes]
    return jnp.where(pos + k < seg, down, up)


def _segmented_reduce(v, pos, seg, op):
    """Tree reduce within each seg-wide lane segment; every lane gets the result."""
    k = 1
    while k < seg:
        v = op(v, _seg_shift(v, pos, k, seg))
        k *= 2
    return v


def _gcn_ensemble_kernel(x_ref, adj_ref, wgc_ref, bgc_ref, wlin_ref, blin_ref,
                         out_ref, emb_ref, xh_ref, *, seg, nclass):
    t = pl.program_id(0)

    # --- hoisted adjacency matmul: xh = adj @ x, computed once, reused per tile
    @pl.when(t == 0)
    def _():
        xh = jnp.dot(adj_ref[...], x_ref[...], preferred_element_type=jnp.float32)
        xh_ref[...] = xh.astype(xh_ref.dtype)      # single (optional bf16) rounding

    # --- GraphConvolution for every student of this lane tile at once --------
    # h[:, s*seg + c] = ((adj @ x) @ W_s)[:, c] + b_s[c]
    h = jnp.dot(xh_ref[...], wgc_ref[...],
                preferred_element_type=jnp.float32) + bgc_ref[...]
    emb = jnp.maximum(h, 0.0)                       # ReLU -> node embeddings
    emb_ref[...] = emb                              # lane-dense store

    # --- per-student log-softmax == segmented softmax over seg-wide segments --
    pos = jax.lax.broadcasted_iota(jnp.int32, emb.shape, 1) % seg
    if nclass < seg:
        # pad-class lanes inside a student's segment never reach max / sum-exp
        z0 = jnp.where(pos < nclass, emb, jnp.float32(-1e30))
    else:
        z0 = emb
    m = _segmented_reduce(z0, pos, seg, jnp.maximum)           # per-segment max
    z = z0 - m
    ssum = _segmented_reduce(jnp.exp(z), pos, seg, jnp.add)    # per-segment sum(exp)
    ls = z - jnp.log(ssum)                                     # log_softmax

    # --- Linear(nfeat -> 1) over the node axis: per-lane weighted sublane sum --
    out_ref[...] = (jnp.sum(wlin_ref[...] * ls, axis=0, keepdims=True)
                    + blin_ref[...])


# ---------------------------------------------------------------------------
# Wrappers
# ---------------------------------------------------------------------------
def pack_ensemble_params(w_gc, b_gc, w_lin, b_lin, *, matmul_dtype=jnp.float32):
    """Pack per-student parameters along the 128-lane class axis (do this once,
    outside the hot loop -- it is layout plumbing, not per-forward work).

    w_gc:  [S, F, C]     GraphConvolution weight per student
    b_gc:  [S, C]        GraphConvolution bias per student
    w_lin: [S, 1, N]     nn.Linear(nfeat, 1) weight per student (torch layout)
    b_lin: [S, 1] / [S]  nn.Linear bias per student
    """
    w_gc = jnp.asarray(w_gc, jnp.float32)
    b_gc = jnp.asarray(b_gc, jnp.float32)
    w_lin = jnp.asarray(w_lin, jnp.float32)
    b_lin = jnp.asarray(b_lin, jnp.float32)

    S, F, C = w_gc.shape
    N = w_lin.shape[-1]
    seg = int(pl.next_power_of_2(max(C, 1)))
    if seg > LANES:
        raise NotImplementedError("nclass > 128 needs a class-tiled layout")
    spt = LANES // seg                       # students per 128-lane tile
    T = (S + spt - 1) // spt                 # lane tiles (grid steps)
    Sp = T * spt
    L = T * LANES

    # W_gc -> [F, L], lane = slot*seg + c ;  pre-cast to matmul dtype once.
    wgc_all = jnp.zeros((Sp, F, seg), jnp.float32).at[:S, :, :C].set(w_gc)
    wgc_all = wgc_all.transpose(1, 0, 2).reshape(F, L).astype(matmul_dtype)

    bgc_all = jnp.zeros((Sp, seg), jnp.float32).at[:S, :C].set(b_gc).reshape(1, L)

    # w_lin[s, 0, :] broadcast across that student's valid class lanes.
    wl = w_lin.reshape(S, N)
    wlin_all = jnp.zeros((Sp, N, seg), jnp.float32)
    wlin_all = wlin_all.at[:S, :, :C].set(jnp.broadcast_to(wl[:, :, None], (S, N, C)))
    wlin_all = wlin_all.transpose(1, 0, 2).reshape(N, L)

    blin_all = jnp.zeros((Sp, seg), jnp.float32).at[:S, :].set(
        jnp.broadcast_to(b_lin.reshape(S, 1), (S, seg))).reshape(1, L)

    return PackedParams(wgc_all, bgc_all, wlin_all, blin_all,
                        n_students=S, n_class=C, seg=seg, n_tiles=int(T))


def gcn_student_ensemble_forward_packed(x, adj, p: PackedParams):
    """All-students fused forward.  Returns PACKED, lane-dense outputs
    (out_packed [1, T*128], emb_packed [N, T*128]) -- no wrapper-side slicing.
    Use `unpack_outputs` in the consumer if the per-student layout is needed."""
    x = jnp.asarray(x, jnp.float32)
    adj = jnp.asarray(adj, jnp.float32)
    N, F = x.shape
    assert p.w_lin.shape[0] == N, "Linear(nfeat,1) acts over nodes: need N == nfeat"
    T = p.n_tiles
    L = T * LANES
    matmul_dtype = p.w_gc.dtype

    kernel = functools.partial(_gcn_ensemble_kernel, seg=p.seg, nclass=p.n_class)

    out_p, emb_p = pl.pallas_call(
        kernel,
        grid_spec=pltpu.PrefetchScalarGridSpec(
            num_scalar_prefetch=0,
            grid=(T,),
            in_specs=[
                pl.BlockSpec((N, F), lambda t: (0, 0)),        # x   (resident)
                pl.BlockSpec((N, N), lambda t: (0, 0)),        # adj (resident)
                pl.BlockSpec((F, LANES), lambda t: (0, t)),    # W_gc lane tile
                pl.BlockSpec((1, LANES), lambda t: (0, t)),    # b_gc lane tile
                pl.BlockSpec((N, LANES), lambda t: (0, t)),    # w_lin lane tile
                pl.BlockSpec((1, LANES), lambda t: (0, t)),    # b_lin lane tile
            ],
            out_specs=(
                pl.BlockSpec((1, LANES), lambda t: (0, t)),    # out  lane tile
                pl.BlockSpec((N, LANES), lambda t: (0, t)),    # emb  lane tile
            ),
            scratch_shapes=[pltpu.VMEM((N, F), matmul_dtype)],  # xh = adj @ x
        ),
        out_shape=(
            jax.ShapeDtypeStruct((1, L), jnp.float32),
            jax.ShapeDtypeStruct((N, L), jnp.float32),
        ),
        compiler_params=pltpu.CompilerParams(
            # lane tiles reuse the step-0 xh scratch -> sequential ("arbitrary");
            # with packing there is usually a single grid step anyway (megacore moot).
            dimension_semantics=("arbitrary",)),
    )(x, adj, p.w_gc, p.b_gc, p.w_lin, p.b_lin)
    return out_p, emb_p


def unpack_outputs(out_packed, emb_packed, p: PackedParams):
    """Consumer-side view into the packed outputs -> module layout
    (out [S, 1, C], node_embeddings [S, N, C])."""
    N = emb_packed.shape[0]
    S, C, seg = p.n_students, p.n_class, p.seg
    slots = emb_packed.shape[1] // seg
    emb = emb_packed.reshape(N, slots, seg)[:, :S, :C].transpose(1, 0, 2)
    out = out_packed.reshape(slots, seg)[:S, :C].reshape(S, 1, C)
    return out, emb


def gcn_student_ensemble_forward(x, adj, w_gc, b_gc, w_lin, b_lin, *,
                                 matmul_dtype=jnp.float32):
    """Convenience wrapper with the module's per-student output layout.
    Hot loops should call pack_ensemble_params once and use the *_packed path."""
    p = pack_ensemble_params(w_gc, b_gc, w_lin, b_lin, matmul_dtype=matmul_dtype)
    out_p, emb_p = gcn_student_ensemble_forward_packed(x, adj, p)
    return unpack_outputs(out_p, emb_p, p)


def gcn_student_forward(x, adj, w_gc, b_gc, w_lin, b_lin, **kwargs):
    """Single-student forward with the exact semantics of the PyTorch module."""
    out, emb = gcn_student_ensemble_forward(
        x, adj, w_gc[None], b_gc[None], w_lin[None], b_lin[None], **kwargs)
    return out[0], emb[0]


def reference_forward(x, adj, w_gc, b_gc, w_lin, b_lin):
    h = adj @ (x @ w_gc) + b_gc[None, :]
    emb = jnp.maximum(h, 0.0)
    ls = jax.nn.log_softmax(emb, axis=1)
    out = (ls.T @ w_lin.T + b_lin).T
    return out, emb


# ---------------------------------------------------------------------------
# Demo / checks
# ---------------------------------------------------------------------------
if __name__ == "__main__":
    def make_inputs(key, N, nclass, S):
        k_x, k_adj, k_wgc, k_bgc, k_wlin, k_blin = jax.random.split(key, 6)
        nfeat = N   # Linear(nfeat, 1) acts over the node axis -> N == nfeat
        x = jax.random.normal(k_x, (N, nfeat), dtype=jnp.float32)
        a = jax.random.uniform(k_adj, (N, N), dtype=jnp.float32)
        adj = (a + a.T) * 0.5 / N   # symmetric "normalized adjacency"-ish
        stdv_gc = 1.0 / math.sqrt(nclass)
        w_gc = jax.random.uniform(k_wgc, (S, nfeat, nclass), jnp.float32, -stdv_gc, stdv_gc)
        b_gc = jax.random.uniform(k_bgc, (S, nclass), jnp.float32, -stdv_gc, stdv_gc)
        stdv_lin = 1.0 / math.sqrt(nfeat)
        w_lin = jax.random.uniform(k_wlin, (S, 1, nfeat), jnp.float32, -stdv_lin, stdv_lin)
        b_lin = jax.random.uniform(k_blin, (S, 1), jnp.float32, -stdv_lin, stdv_lin)
        return x, adj, w_gc, b_gc, w_lin, b_lin

    def check(x, adj, w_gc, b_gc, w_lin, b_lin, out, emb, atol, rtol):
        for s in range(w_gc.shape[0]):
            r_out, r_emb = reference_forward(x, adj, w_gc[s], b_gc[s], w_lin[s], b_lin[s])
            assert jnp.allclose(out[s], r_out, atol=atol, rtol=rtol), f"out mismatch s={s}"
            assert jnp.allclose(emb[s], r_emb, atol=atol, rtol=rtol), f"emb mismatch s={s}"

    # --- main config: S=4 students, C=8 classes -> all students in ONE lane tile
    N, C, S = 32, 8, 4
    x, adj, w_gc, b_gc, w_lin, b_lin = make_inputs(jax.random.PRNGKey(0), N, C, S)

    params = pack_ensemble_params(w_gc, b_gc, w_lin, b_lin)          # once, offline
    out_p, emb_p = gcn_student_ensemble_forward_packed(x, adj, params)  # packed path
    jax.block_until_ready((out_p, emb_p))
    out, emb = unpack_outputs(out_p, emb_p, params)                  # consumer-side view
    assert out.shape == (S, 1, C) and emb.shape == (S, N, C)
    check(x, adj, w_gc, b_gc, w_lin, b_lin, out, emb, atol=5e-4, rtol=5e-4)

    # --- single-student path (exact module forward) ---
    o1, e1 = gcn_student_forward(x, adj, w_gc[0], b_gc[0], w_lin[0], b_lin[0])
    r_o, r_e = reference_forward(x, adj, w_gc[0], b_gc[0], w_lin[0], b_lin[0])
    assert jnp.allclose(o1, r_o, atol=5e-4, rtol=5e-4)
    assert jnp.allclose(e1, r_e, atol=5e-4, rtol=5e-4)

    # --- bf16 MXU operands (v6e/v7x): xh rounded once, f32 accumulation -------
    out16, emb16 = gcn_student_ensemble_forward(
        x, adj, w_gc, b_gc, w_lin, b_lin, matmul_dtype=jnp.bfloat16)
    jax.block_until_ready((out16, emb16))
    check(x, adj, w_gc, b_gc, w_lin, b_lin, out16, emb16, atol=5e-2, rtol=5e-2)

    # --- ragged config: C=6 (< seg=8) exercises pad-class masking, S=5 leaves
    #     unused student slots in the tile
    x2, adj2, w2, b2, wl2, bl2 = make_inputs(jax.random.PRNGKey(1), 32, 6, 5)
    out2, emb2 = gcn_student_ensemble_forward(x2, adj2, w2, b2, wl2, bl2)
    jax.block_until_ready((out2, emb2))
    check(x2, adj2, w2, b2, wl2, bl2, out2, emb2, atol=5e-4, rtol=5e-4)

    # --- multi-tile config: S=20 at C=8 -> grid=(2,); xh scratch computed at
    #     step 0 and reused at step 1
    x3, adj3, w3, b3, wl3, bl3 = make_inputs(jax.random.PRNGKey(2), 32, 8, 20)
    out3, emb3 = gcn_student_ensemble_forward(x3, adj3, w3, b3, wl3, bl3)
    jax.block_until_ready((out3, emb3))
    check(x3, adj3, w3, b3, wl3, bl3, out3, emb3, atol=5e-4, rtol=5e-4)

    print("KERNEL_OK")
</pallas_src>

<mosaic_0001>
module attributes {stable_mosaic.version = 11 : i64} {
  func.func @_gcn_ensemble_kernel(%arg0: i32, %arg1: memref<32x32xf32, #tpu.memory_space<vmem>>, %arg2: memref<32x32xf32, #tpu.memory_space<vmem>>, %arg3: memref<32x128xf32, #tpu.memory_space<vmem>>, %arg4: memref<1x128xf32, #tpu.memory_space<vmem>>, %arg5: memref<32x128xf32, #tpu.memory_space<vmem>>, %arg6: memref<1x128xf32, #tpu.memory_space<vmem>>, %arg7: memref<1x128xf32, #tpu.memory_space<vmem>>, %arg8: memref<32x128xf32, #tpu.memory_space<vmem>>, %arg9: memref<32x32xf32, #tpu.memory_space<vmem>>) attributes {dimension_semantics = [#tpu.dimension_semantics<arbitrary>], iteration_bounds = array<i64: 1>, scalar_prefetch = 0 : i64, scratch_operands = 1 : i64, tpu.core_type = #tpu.core_type<tc>, window_params = [{pipeline_mode = #tpu.pipeline_mode<synchronous>, transform_indices = @transform_0, window_bounds = array<i64: 32, 32>}, {pipeline_mode = #tpu.pipeline_mode<synchronous>, transform_indices = @transform_1, window_bounds = array<i64: 32, 32>}, {transform_indices = @transform_2, window_bounds = array<i64: 32, 128>}, {transform_indices = @transform_3, window_bounds = array<i64: 1, 128>}, {transform_indices = @transform_4, window_bounds = array<i64: 32, 128>}, {transform_indices = @transform_5, window_bounds = array<i64: 1, 128>}, {transform_indices = @transform_6, window_bounds = array<i64: 1, 128>}, {transform_indices = @transform_7, window_bounds = array<i64: 32, 128>}]} {
    %c0_i32 = arith.constant 0 : i32
    %0 = arith.cmpi eq, %arg0, %c0_i32 : i32
    %1 = arith.extui %0 : i1 to i32
    %c0_i32_0 = arith.constant 0 : i32
    %2 = arith.cmpi ne, %1, %c0_i32_0 : i32
    scf.if %2 {
      %c0_37 = arith.constant 0 : index
      %c0_38 = arith.constant 0 : index
      %88 = vector.load %arg2[%c0_37, %c0_38] : memref<32x32xf32, #tpu.memory_space<vmem>>, vector<32x32xf32>
      %c0_39 = arith.constant 0 : index
      %c0_40 = arith.constant 0 : index
      %89 = vector.load %arg1[%c0_39, %c0_40] : memref<32x32xf32, #tpu.memory_space<vmem>>, vector<32x32xf32>
      %cst_41 = arith.constant dense<0.000000e+00> : vector<32x32xf32>
      %90 = tpu.matmul %88, %89, %cst_41 {dimension_numbers = #tpu.dot_dimension_numbers<[1], [0], [0], [1], [0, 0, 1, 1], [], []>} : vector<32x32xf32>, vector<32x32xf32>, vector<32x32xf32> -> vector<32x32xf32>
      %c0_42 = arith.constant 0 : index
      %c0_43 = arith.constant 0 : index
      %91 = vector.load %arg9[%c0_42, %c0_43] : memref<32x32xf32, #tpu.memory_space<vmem>>, vector<32x32xf32>
      tpu.vector_store %arg9[%c0_42, %c0_43], %90 {strides = array<i32>} : memref<32x32xf32, #tpu.memory_space<vmem>>, vector<32x32xf32>,
    } else {
    }
    %c0 = arith.constant 0 : index
    %c0_1 = arith.constant 0 : index
    %3 = vector.load %arg9[%c0, %c0_1] : memref<32x32xf32, #tpu.memory_space<vmem>>, vector<32x32xf32>
    %c0_2 = arith.constant 0 : index
    %c0_3 = arith.constant 0 : index
    %4 = vector.load %arg3[%c0_2, %c0_3] : memref<32x128xf32, #tpu.memory_space<vmem>>, vector<32x128xf32>
    %cst = arith.constant dense<0.000000e+00> : vector<32x128xf32>
    %5 = tpu.matmul %3, %4, %cst {dimension_numbers = #tpu.dot_dimension_numbers<[1], [0], [0], [1], [0, 0, 1, 1], [], []>} : vector<32x32xf32>, vector<32x128xf32>, vector<32x128xf32> -> vector<32x128xf32>
    %c0_4 = arith.constant 0 : index
    %c0_5 = arith.constant 0 : index
    %6 = vector.load %arg4[%c0_4, %c0_5] : memref<1x128xf32, #tpu.memory_space<vmem>>, vector<1x128xf32>
    %7 = vector.broadcast %6 : vector<1x128xf32> to vector<32x128xf32>
    %8 = arith.addf %5, %7 : vector<32x128xf32>
    %cst_6 = arith.constant 0.000000e+00 : f32
    %9 = vector.broadcast %cst_6 : f32 to vector<32x128xf32>
    %10 = arith.maximumf %8, %9 : vector<32x128xf32>
    %c0_7 = arith.constant 0 : index
    %c0_8 = arith.constant 0 : index
    %11 = vector.load %arg8[%c0_7, %c0_8] : memref<32x128xf32, #tpu.memory_space<vmem>>, vector<32x128xf32>
    tpu.vector_store %arg8[%c0_7, %c0_8], %10 {strides = array<i32>} : memref<32x128xf32, #tpu.memory_space<vmem>>, vector<32x128xf32>,
    %12 = tpu.iota {dimensions = array<i32: 1>} : vector<32x128xi32>
    %c8_i32 = arith.constant 8 : i32
    %c0_i32_9 = arith.constant 0 : i32
    %13 = arith.cmpi eq, %c8_i32, %c0_i32_9 : i32
    %c1_i32 = arith.constant 1 : i32
    %14 = arith.select %13, %c1_i32, %c8_i32 : i32
    %15 = vector.broadcast %14 : i32 to vector<32x128xi32>
    %16 = arith.remsi %12, %15 : vector<32x128xi32>
    %c0_i32_10 = arith.constant 0 : i32
    %17 = vector.broadcast %c0_i32_10 : i32 to vector<32x128xi32>
    %18 = arith.cmpi ne, %16, %17 : vector<32x128xi32>
    %c0_i32_11 = arith.constant 0 : i32
    %19 = vector.broadcast %c0_i32_11 : i32 to vector<32x128xi32>
    %20 = arith.cmpi slt, %16, %19 : vector<32x128xi32>
    %c0_i32_12 = arith.constant 0 : i32
    %21 = arith.cmpi slt, %14, %c0_i32_12 : i32
    %22 = vector.broadcast %21 : i1 to vector<32x128xi1>
    %23 = vector.broadcast %22 : vector<32x128xi1> to vector<32x128xi1>
    %24 = arith.xori %20, %23 : vector<32x128xi1>
    %25 = arith.andi %24, %18 : vector<32x128xi1>
    %26 = vector.broadcast %14 : i32 to vector<32x128xi32>
    %27 = arith.addi %16, %26 : vector<32x128xi32>
    %28 = arith.select %25, %27, %16 : vector<32x128xi1>, vector<32x128xi32>
    %c127_i32 = arith.constant 127 : i32
    %29 = tpu.dynamic_rotate %10 by %c127_i32 dim 1 : vector<32x128xf32>, i32 -> vector<32x128xf32>
    %c7_i32 = arith.constant 7 : i32
    %30 = tpu.dynamic_rotate %10 by %c7_i32 dim 1 : vector<32x128xf32>, i32 -> vector<32x128xf32>
    %c1_i32_13 = arith.constant 1 : i32
    %31 = vector.broadcast %c1_i32_13 : i32 to vector<32x128xi32>
    %32 = arith.addi %28, %31 : vector<32x128xi32>
    %c8_i32_14 = arith.constant 8 : i32
    %33 = vector.broadcast %c8_i32_14 : i32 to vector<32x128xi32>
    %34 = arith.cmpi slt, %32, %33 : vector<32x128xi32>
    %35 = arith.select %34, %29, %30 : vector<32x128xi1>, vector<32x128xf32>
    %36 = arith.maximumf %10, %35 : vector<32x128xf32>
    %c126_i32 = arith.constant 126 : i32
    %37 = tpu.dynamic_rotate %36 by %c126_i32 dim 1 : vector<32x128xf32>, i32 -> vector<32x128xf32>
    %c6_i32 = arith.constant 6 : i32
    %38 = tpu.dynamic_rotate %36 by %c6_i32 dim 1 : vector<32x128xf32>, i32 -> vector<32x128xf32>
    %c2_i32 = arith.constant 2 : i32
    %39 = vector.broadcast %c2_i32 : i32 to vector<32x128xi32>
    %40 = arith.addi %28, %39 : vector<32x128xi32>
    %c8_i32_15 = arith.constant 8 : i32
    %41 = vector.broadcast %c8_i32_15 : i32 to vector<32x128xi32>
    %42 = arith.cmpi slt, %40, %41 : vector<32x128xi32>
    %43 = arith.select %42, %37, %38 : vector<32x128xi1>, vector<32x128xf32>
    %44 = arith.maximumf %36, %43 : vector<32x128xf32>
    %c124_i32 = arith.constant 124 : i32
    %45 = tpu.dynamic_rotate %44 by %c124_i32 dim 1 : vector<32x128xf32>, i32 -> vector<32x128xf32>
    %c4_i32 = arith.constant 4 : i32
    %46 = tpu.dynamic_rotate %44 by %c4_i32 dim 1 : vector<32x128xf32>, i32 -> vector<32x128xf32>
    %c4_i32_16 = arith.constant 4 : i32
    %47 = vector.broadcast %c4_i32_16 : i32 to vector<32x128xi32>
    %48 = arith.addi %28, %47 : vector<32x128xi32>
    %c8_i32_17 = arith.constant 8 : i32
    %49 = vector.broadcast %c8_i32_17 : i32 to vector<32x128xi32>
    %50 = arith.cmpi slt, %48, %49 : vector<32x128xi32>
    %51 = arith.select %50, %45, %46 : vector<32x128xi1>, vector<32x128xf32>
    %52 = arith.maximumf %44, %51 : vector<32x128xf32>
    %53 = arith.subf %10, %52 : vector<32x128xf32>
    %54 = math.exp %53 : vector<32x128xf32>
    %c127_i32_18 = arith.constant 127 : i32
    %55 = tpu.dynamic_rotate %54 by %c127_i32_18 dim 1 : vector<32x128xf32>, i32 -> vector<32x128xf32>
    %c7_i32_19 = arith.constant 7 : i32
    %56 = tpu.dynamic_rotate %54 by %c7_i32_19 dim 1 : vector<32x128xf32>, i32 -> vector<32x128xf32>
    %c1_i32_20 = arith.constant 1 : i32
    %57 = vector.broadcast %c1_i32_20 : i32 to vector<32x128xi32>
    %58 = arith.addi %28, %57 : vector<32x128xi32>
    %c8_i32_21 = arith.constant 8 : i32
    %59 = vector.broadcast %c8_i32_21 : i32 to vector<32x128xi32>
    %60 = arith.cmpi slt, %58, %59 : vector<32x128xi32>
    %61 = arith.select %60, %55, %56 : vector<32x128xi1>, vector<32x128xf32>
    %62 = arith.addf %54, %61 : vector<32x128xf32>
    %c126_i32_22 = arith.constant 126 : i32
    %63 = tpu.dynamic_rotate %62 by %c126_i32_22 dim 1 : vector<32x128xf32>, i32 -> vector<32x128xf32>
    %c6_i32_23 = arith.constant 6 : i32
    %64 = tpu.dynamic_rotate %62 by %c6_i32_23 dim 1 : vector<32x128xf32>, i32 -> vector<32x128xf32>
    %c2_i32_24 = arith.constant 2 : i32
    %65 = vector.broadcast %c2_i32_24 : i32 to vector<32x128xi32>
    %66 = arith.addi %28, %65 : vector<32x128xi32>
    %c8_i32_25 = arith.constant 8 : i32
    %67 = vector.broadcast %c8_i32_25 : i32 to vector<32x128xi32>
    %68 = arith.cmpi slt, %66, %67 : vector<32x128xi32>
    %69 = arith.select %68, %63, %64 : vector<32x128xi1>, vector<32x128xf32>
    %70 = arith.addf %62, %69 : vector<32x128xf32>
    %c124_i32_26 = arith.constant 124 : i32
    %71 = tpu.dynamic_rotate %70 by %c124_i32_26 dim 1 : vector<32x128xf32>, i32 -> vector<32x128xf32>
    %c4_i32_27 = arith.constant 4 : i32
    %72 = tpu.dynamic_rotate %70 by %c4_i32_27 dim 1 : vector<32x128xf32>, i32 -> vector<32x128xf32>
    %c4_i32_28 = arith.constant 4 : i32
    %73 = vector.broadcast %c4_i32_28 : i32 to vector<32x128xi32>
    %74 = arith.addi %28, %73 : vector<32x128xi32>
    %c8_i32_29 = arith.constant 8 : i32
    %75 = vector.broadcast %c8_i32_29 : i32 to vector<32x128xi32>
    %76 = arith.cmpi slt, %74, %75 : vector<32x128xi32>
    %77 = arith.select %76, %71, %72 : vector<32x128xi1>, vector<32x128xf32>
    %78 = arith.addf %70, %77 : vector<32x128xf32>
    %79 = math.log %78 : vector<32x128xf32>
    %80 = arith.subf %53, %79 : vector<32x128xf32>
    %c0_30 = arith.constant 0 : index
    %c0_31 = arith.constant 0 : index
    %81 = vector.load %arg5[%c0_30, %c0_31] : memref<32x128xf32, #tpu.memory_space<vmem>>, vector<32x128xf32>
    %82 = arith.mulf %81, %80 : vector<32x128xf32>
    %cst_32 = arith.constant dense<0.000000e+00> : vector<128xf32>
    %83 = vector.multi_reduction <add>, %82, %cst_32 [0] : vector<32x128xf32> to vector<128xf32>
    %84 = vector.shape_cast %83 : vector<128xf32> to vector<1x128xf32>
    %c0_33 = arith.constant 0 : index
    %c0_34 = arith.constant 0 : index
    %85 = vector.load %arg6[%c0_33, %c0_34] : memref<1x128xf32, #tpu.memory_space<vmem>>, vector<1x128xf32>
    %86 = arith.addf %84, %85 : vector<1x128xf32>
    %c0_35 = arith.constant 0 : index
    %c0_36 = arith.constant 0 : index
    %87 = vector.load %arg7[%c0_35, %c0_36] : memref<1x128xf32, #tpu.memory_space<vmem>>, vector<1x128xf32>
    tpu.vector_store %arg7[%c0_35, %c0_36], %86 {strides = array<i32>} : memref<1x128xf32, #tpu.memory_space<vmem>>, vector<1x128xf32>,
    return
  }
  func.func @transform_0(%arg0: i32) -> (i32, i32) {
    %c0_i32 = arith.constant 0 : i32
    %c0_i32_0 = arith.constant 0 : i32
    %c0_i32_1 = arith.constant 0 : i32
    return %c0_i32, %c0_i32_0 : i32, i32
  }
  func.func @transform_1(%arg0: i32) -> (i32, i32) {
    %c0_i32 = arith.constant 0 : i32
    %c0_i32_0 = arith.constant 0 : i32
    %c0_i32_1 = arith.constant 0 : i32
    return %c0_i32, %c0_i32_0 : i32, i32
  }
  func.func @transform_2(%arg0: i32) -> (i32, i32) {
    %c0_i32 = arith.constant 0 : i32
    %c0_i32_0 = arith.constant 0 : i32
    return %c0_i32, %arg0 : i32, i32
  }
  func.func @transform_3(%arg0: i32) -> (i32, i32) {
    %c0_i32 = arith.constant 0 : i32
    %c0_i32_0 = arith.constant 0 : i32
    return %c0_i32, %arg0 : i32, i32
  }
  func.func @transform_4(%arg0: i32) -> (i32, i32) {
    %c0_i32 = arith.constant 0 : i32
    %c0_i32_0 = arith.constant 0 : i32
    return %c0_i32, %arg0 : i32, i32
  }
  func.func @transform_5(%arg0: i32) -> (i32, i32) {
    %c0_i32 = arith.constant 0 : i32
    %c0_i32_0 = arith.constant 0 : i32
    return %c0_i32, %arg0 : i32, i32
  }
  func.func @transform_6(%arg0: i32) -> (i32, i32) {
    %c0_i32 = arith.constant 0 : i32
    %c0_i32_0 = arith.constant 0 : i32
    return %c0_i32, %arg0 : i32, i32
  }
  func.func @transform_7(%arg0: i32) -> (i32, i32) {
    %c0_i32 = arith.constant 0 : i32
    %c0_i32_0 = arith.constant 0 : i32
    return %c0_i32, %arg0 : i32, i32
  }
}

</mosaic_0001>

<llo_original>
// kernel: tpu_custom_call.1
$region0: #{tpu_custom_call.1}
  #allocation0 [shape = 'u32[]', space=smem, size = 0x4, offset = 0x4, fixed_abs, tag = 'smem constant byte address 0x4 - core index']
  #allocation1 [shape = 'u32[144,128]{1,0:T(1,128)}', space=vmem, size = 0x12000, scoped, tag = 'internal scratch']
  #allocation2 [shape = 'f32[32,32]{1,0:T(8,128)}', space=vmem, size = 0x4000, scoped, tag = 'scratch operand']
  %s0 = inlined_call_operand.hbm [shape: f32[32,32], index: 0, kind: input, shape index: {}]
  %s1 = inlined_call_operand.hbm [shape: f32[32,32], index: 1, kind: input, shape index: {}]
  %s2 = inlined_call_operand.hbm [shape: f32[32,128], index: 2, kind: input, shape index: {}]
  %s3 = inlined_call_operand.vmem [shape: f32[1,128], index: 3, kind: input, shape index: {}]
  %s4 = inlined_call_operand.hbm [shape: f32[32,128], index: 4, kind: input, shape index: {}]
  %s5 = inlined_call_operand.vmem [shape: f32[1,128], index: 5, kind: input, shape index: {}]
  %s6 = inlined_call_operand.hbm [shape: f32[1,128], index: 6, kind: output, shape index: {0}]
  %s7 = inlined_call_operand.hbm [shape: f32[32,128], index: 7, kind: output, shape index: {1}]
  %8 = xla_tuple %s6, %s7
  %s9 = sld [smem:[#allocation0]]
  $region62: #{tpu_custom_call.1} parent=0
    _
  %s11 = ssub.s32 1, %s9
  %s12 = scalar_select 0, %s11, %s9
  $region1: #{tpu_custom_call.1} parent=0
    #allocation3 [shape = 'u8[16384]{0}', space=vmem, size = 0x4000, scoped, tag = 'input window, operand 0, single buffered']
    #allocation4 [shape = 's32[1]{0}', space=sflag, size = 0x4, scoped, tag = 'scoped memory for tpu_custom_call.1']
    #allocation5 [shape = 's32[1]{0}', space=sflag, size = 0x4, scoped, tag = 'scoped memory for tpu_custom_call.1']
    #allocation6 [shape = 'u8[16384]{0}', space=vmem, size = 0x4000, scoped, tag = 'input window, operand 1, single buffered']
    #allocation7 [shape = 's32[1]{0}', space=sflag, size = 0x4, scoped, tag = 'scoped memory for tpu_custom_call.1']
    #allocation8 [shape = 'u8[16384]{0}', space=vmem, size = 0x4000, scoped, tag = 'input window, operand 2, single buffered']
    #allocation9 [shape = 'u8[16384]{0}', space=vmem, size = 0x4000, scoped, tag = 'input window, operand 4, single buffered']
    #allocation10 [shape = 's32[1]{0}', space=sflag, size = 0x4, scoped, tag = 'scoped memory for tpu_custom_call.1']
    #allocation11 [shape = 'u8[512]{0}', space=vmem, size = 0x400, scoped, tag = 'output window, operand 0, single buffered']
    #allocation12 [shape = 'u8[16384]{0}', space=vmem, size = 0x4000, scoped, tag = 'output window, operand 1, single buffered']
    #allocation13 [shape = 's32[1]{0}', space=sflag, size = 0x4, scoped, tag = 'scoped memory for tpu_custom_call.1']
    %13 = vsyncpa [#allocation4], 0
    %14 = vsyncpa [#allocation7], 0
    %15 = vsyncpa [#allocation10], 0
    %16 = vsyncpa [#allocation5], 0
    %17 = vsyncpa [#allocation13], 0
    // Predicated region
    $region2: #{tpu_custom_call.1} parent=1 // pred_check
      _
    $region3: #{tpu_custom_call.1} parent=1 // pred_check_branch
      %19 = sbr.rel (0) target = $region5
    $region4: #{tpu_custom_call.1} parent=1 // pred_region
      %s21 = ssub.s32 512, 512
      %22 = vsyncadd [#allocation4], %s21
      %s23 = sshll.u32 [#allocation3], 4
      %s24 = int_to_ptr.vmem [resolvable:$true] %s23
      %29 = dma.hbm_to_vmem [thread:$0]  %s0, 512, %s24, [#allocation4], 128, 128, 8
    $region5: #{tpu_custom_call.1} parent=1 // pred_fallthru
      _
    // Predicated region
    $region6: #{tpu_custom_call.1} parent=1 // pred_check
      _
    $region7: #{tpu_custom_call.1} parent=1 // pred_check_branch
      %31 = sbr.rel (0) target = $region9
    $region8: #{tpu_custom_call.1} parent=1 // pred_region
      %s33 = ssub.s32 512, 512
      %34 = vsyncadd [#allocation7], %s33
      %s35 = sshll.u32 [#allocation6], 4
      %s36 = int_to_ptr.vmem [resolvable:$true] %s35
      %41 = dma.hbm_to_vmem [thread:$0]  %s1, 512, %s36, [#allocation7], 128, 128, 8
    $region9: #{tpu_custom_call.1} parent=1 // pred_fallthru
      _
    // Predicated region
    $region10: #{tpu_custom_call.1} parent=1 // pred_check
      _
    $region11: #{tpu_custom_call.1} parent=1 // pred_check_branch
      %43 = sbr.rel (0) target = $region13
    $region12: #{tpu_custom_call.1} parent=1 // pred_region
      %s45 = ssub.s32 512, 512
      %46 = vsyncadd [#allocation7], %s45
      %s47 = sshll.u32 [#allocation8], 4
      %s48 = int_to_ptr.vmem [resolvable:$true] %s47
      %53 = dma.hbm_to_vmem [thread:$0]  %s2, 512, %s48, [#allocation7], 128, 128, 8
    $region13: #{tpu_custom_call.1} parent=1 // pred_fallthru
      _
    // Predicated region
    $region14: #{tpu_custom_call.1} parent=1 // pred_check
      _
    $region15: #{tpu_custom_call.1} parent=1 // pred_check_branch
      %55 = sbr.rel (0) target = $region17
    $region16: #{tpu_custom_call.1} parent=1 // pred_region
      _
    $region17: #{tpu_custom_call.1} parent=1 // pred_fallthru
      _
    // Predicated region
    $region18: #{tpu_custom_call.1} parent=1 // pred_check
      _
    $region19: #{tpu_custom_call.1} parent=1 // pred_check_branch
      %57 = sbr.rel (0) target = $region21
    $region20: #{tpu_custom_call.1} parent=1 // pred_region
      %s59 = ssub.s32 512, 512
      %60 = vsyncadd [#allocation10], %s59
      %s61 = sshll.u32 [#allocation9], 4
      %s62 = int_to_ptr.vmem [resolvable:$true] %s61
      %67 = dma.hbm_to_vmem [thread:$0]  %s4, 512, %s62, [#allocation10], 128, 128, 8
    $region21: #{tpu_custom_call.1} parent=1 // pred_fallthru
      _
    // Predicated region
    $region22: #{tpu_custom_call.1} parent=1 // pred_check
      _
    $region23: #{tpu_custom_call.1} parent=1 // pred_check_branch
      %69 = sbr.rel (0) target = $region25
    $region24: #{tpu_custom_call.1} parent=1 // pred_region
      _
    $region25: #{tpu_custom_call.1} parent=1 // pred_fallthru
      _
    // Predicated region
    $region26: #{tpu_custom_call.1} parent=1 // pred_check
      _
    $region27: #{tpu_custom_call.1} parent=1 // pred_check_branch
      %71 = sbr.rel (0) target = $region29
    $region28: #{tpu_custom_call.1} parent=1 // pred_region
      %72 = dma.done [#allocation4], 512
    $region29: #{tpu_custom_call.1} parent=1 // pred_fallthru
      _
    // Predicated region
    $region30: #{tpu_custom_call.1} parent=1 // pred_check
      _
    $region31: #{tpu_custom_call.1} parent=1 // pred_check_branch
      %74 = sbr.rel (0) target = $region33
    $region32: #{tpu_custom_call.1} parent=1 // pred_region
      %75 = dma.done [#allocation7], 512
    $region33: #{tpu_custom_call.1} parent=1 // pred_fallthru
      _
    // Predicated region
    $region34: #{tpu_custom_call.1} parent=1 // pred_check
      _
    $region35: #{tpu_custom_call.1} parent=1 // pred_check_branch
      %77 = sbr.rel (0) target = $region37
    $region36: #{tpu_custom_call.1} parent=1 // pred_region
      %78 = dma.done [#allocation7], 512
    $region37: #{tpu_custom_call.1} parent=1 // pred_fallthru
      _
    // Predicated region
    $region38: #{tpu_custom_call.1} parent=1 // pred_check
      _
    $region39: #{tpu_custom_call.1} parent=1 // pred_check_branch
      %80 = sbr.rel (0) target = $region41
    $region40: #{tpu_custom_call.1} parent=1 // pred_region
      %81 = dma.done [#allocation10], 512
    $region41: #{tpu_custom_call.1} parent=1 // pred_fallthru
      _
    %p82 = scmp.eq.s32.totalorder 0, 0
    // Predicated region
    $region42: #{tpu_custom_call.1} parent=1 // pred_check
      %p83 = pneg %p82
    $region43: #{tpu_custom_call.1} parent=1 // pred_check_branch
      %85 = sbr.rel (%p83) target = $region45
    $region44: #{tpu_custom_call.1} parent=1 // pred_region
      %v86 = vld [vmem:[#allocation6] sm:$0xff]
      %v87 = vld [vmem:[#allocation6 + $0x8] sm:$0xff]
      %v88 = vld [vmem:[#allocation6 + $0x10] sm:$0xff]
      %v89 = vld [vmem:[#allocation6 + $0x18] sm:$0xff]
      %v90 = vld [vmem:[#allocation3] sm:$0xff]
      %v91 = vld [vmem:[#allocation3 + $0x8] sm:$0xff]
      %v92 = vld [vmem:[#allocation3 + $0x10] sm:$0xff]
      %v93 = vld [vmem:[#allocation3 + $0x18] sm:$0xff]
      %vm94 = vcmask 261120
      %v96 = vsel %vm94, %v86, 0
      %v99 = vsel %vm94, %v87, 0
      %v102 = vsel %vm94, %v88, 0
      %v105 = vsel %vm94, %v89, 0
      %107 = vmatprep.subr.mxu0 0.0
      %108 = vmatpush1.msra.mxu0 %v90
      %109 = vmatprep.subr.mxu0 0.0
      %110 = vmatpush1.msra.mxu0 %v91
      %111 = vmatprep.subr.mxu0 0.0
      %112 = vmatpush1.msra.mxu0 %v92
      %113 = vmatprep.subr.mxu0 0.0
      %114 = vmatpush1.msra.mxu0 %v93
      %115 = vmatprep.subr.mxu0 0.0
      %116 = vmatpush1.msra.mxu0 0.0
      %117 = vmatprep.subr.mxu0 0.0
      %118 = vmatpush1.msra.mxu0 0.0
      %119 = vmatprep.subr.mxu0 0.0
      %120 = vmatpush1.msra.mxu0 0.0
      %121 = vmatprep.subr.mxu0 0.0
      %122 = vmatpush1.msra.mxu0 0.0
      %123 = vmatprep.subr.mxu0 0.0
      %124 = vmatpush1.msra.mxu0 0.0
      %125 = vmatprep.subr.mxu0 0.0
      %126 = vmatpush1.msra.mxu0 0.0
      %127 = vmatprep.subr.mxu0 0.0
      %128 = vmatpush1.msra.mxu0 0.0
      %129 = vmatprep.subr.mxu0 0.0
      %130 = vmatpush1.msra.mxu0 0.0
      %131 = vmatprep.subr.mxu0 0.0
      %132 = vmatpush1.msra.mxu0 0.0
      %133 = vmatprep.subr.mxu0 0.0
      %134 = vmatpush1.msra.mxu0 0.0
      %135 = vmatprep.subr.mxu0 0.0
      %136 = vmatpush1.msra.mxu0 0.0
      %137 = vmatprep.subr.mxu0 0.0
      %138 = vmatpush1.msra.mxu0 0.0
      %139 = vmatprep.subr.mxu0 0.0
      %140 = vmatpush1.msra.mxu0 0.0
      %141 = vmatprep.subr.mxu0 0.0
      %142 = vmatpush1.msra.mxu0 0.0
      %143 = vmatprep.subr.mxu0 0.0
      %144 = vmatpush1.msra.mxu0 0.0
      %145 = vmatprep.subr.mxu0 0.0
      %146 = vmatpush1.msra.mxu0 0.0
      %147 = vmatprep.subr.mxu0 0.0
      %148 = vmatpush1.msra.mxu0 0.0
      %149 = vmatprep.subr.mxu0 0.0
      %150 = vmatpush1.msra.mxu0 0.0
      %151 = vmatprep.subr.mxu0 0.0
      %152 = vmatpush1.msra.mxu0 0.0
      %153 = vmatprep.subr.mxu0 0.0
      %154 = vmatpush1.msra.mxu0 0.0
      %155 = vmatprep.subr.mxu0 0.0
      %156 = vmatpush1.msra.mxu0 0.0
      %157 = vmatprep.subr.mxu0 0.0
      %158 = vmatpush1.msra.mxu0 0.0
      %159 = vmatprep.subr.mxu0 0.0
      %160 = vmatpush1.msra.mxu0 0.0
      %161 = vmatprep.subr.mxu0 0.0
      %162 = vmatpush1.msra.mxu0 0.0
      %163 = vmatprep.subr.mxu0 0.0
      %164 = vmatpush1.msra.mxu0 0.0
      %165 = vmatprep.subr.mxu0 0.0
      %166 = vmatpush1.msra.mxu0 0.0
      %167 = vmatprep.subr.mxu0 0.0
      %168 = vmatpush1.msra.mxu0 0.0
      %169 = vmatprep.subr.mxu0 0.0
      %170 = vmatpush1.msra.mxu0 0.0
      %171 = vmatprep.mubr.f32.mxu0 0.0
      %172 = vmatmul.mubr.f32.gmra.mrb[0].mxu0 %v96
      %v173 = vpop.f32.mrb[0].mxu0
      %v174 = vadd.f32 0.0, %v173
      %v175 = vpop.f32.mrb[0].mxu0
      %176 = vmatprep.mubr.f32.mxu0 0.0
      %177 = vmatmul.mubr.f32.gmra.mrb[0].mxu0 %v99
      %v178 = vpop.f32.mrb[0].mxu0
      %v179 = vadd.f32 0.0, %v178
      %v180 = vpop.f32.mrb[0].mxu0
      %181 = vmatprep.mubr.f32.mxu0 0.0
      %182 = vmatmul.mubr.f32.gmra.mrb[0].mxu0 %v102
      %v183 = vpop.f32.mrb[0].mxu0
      %v184 = vadd.f32 0.0, %v183
      %v185 = vpop.f32.mrb[0].mxu0
      %186 = vmatprep.mubr.f32.mxu0 0.0
      %187 = vmatmul.mubr.f32.gmra.mrb[0].mxu0 %v105
      %v188 = vpop.f32.mrb[0].mxu0
      %v189 = vadd.f32 0.0, %v188
      %v190 = vpop.f32.mrb[0].mxu0
      %191 = vdwg.mxu0
      %192 = vst.msk [vmem:[#allocation2] sm:$0xff] %vm94, %v174
      %193 = vst.msk [vmem:[#allocation2 + $0x8] sm:$0xff] %vm94, %v179
      %194 = vst.msk [vmem:[#allocation2 + $0x10] sm:$0xff] %vm94, %v184
      %195 = vst.msk [vmem:[#allocation2 + $0x18] sm:$0xff] %vm94, %v189
    $region45: #{tpu_custom_call.1} parent=1 // pred_fallthru
      _
    %v196 = vld [vmem:[#allocation2] sm:$0xff]
    %v197 = vld [vmem:[#allocation2 + $0x8] sm:$0xff]
    %v198 = vld [vmem:[#allocation2 + $0x10] sm:$0xff]
    %v199 = vld [vmem:[#allocation2 + $0x18] sm:$0xff]
    %v200 = vld [vmem:[#allocation8] sm:$0xff]
    %v201 = vld [vmem:[#allocation8 + $0x8] sm:$0xff]
    %v202 = vld [vmem:[#allocation8 + $0x10] sm:$0xff]
    %v203 = vld [vmem:[#allocation8 + $0x18] sm:$0xff]
    %v204 = vld [vmem:[%s3] sm:$0x1]
    %v206 = vlaneseq
    %v207 = vshrl.u32 %v206, 7
    %v208 = vsub.s32 0, %v207
    %v209 = vrot.slane %v204, %v208
    %vm211 = vcmask 261120
    %v213 = vsel %vm211, %v196, 0
    %v216 = vsel %vm211, %v197, 0
    %v219 = vsel %vm211, %v198, 0
    %v222 = vsel %vm211, %v199, 0
    %224 = vmatprep.subr.mxu0 0.0
    %225 = vmatpush1.msra.mxu0 %v200
    %226 = vmatprep.subr.mxu0 0.0
    %227 = vmatpush1.msra.mxu0 %v201
    %228 = vmatprep.subr.mxu0 0.0
    %229 = vmatpush1.msra.mxu0 %v202
    %230 = vmatprep.subr.mxu0 0.0
    %231 = vmatpush1.msra.mxu0 %v203
    %232 = vmatprep.subr.mxu0 0.0
    %233 = vmatpush1.msra.mxu0 0.0
    %234 = vmatprep.subr.mxu0 0.0
    %235 = vmatpush1.msra.mxu0 0.0
    %236 = vmatprep.subr.mxu0 0.0
    %237 = vmatpush1.msra.mxu0 0.0
    %238 = vmatprep.subr.mxu0 0.0
    %239 = vmatpush1.msra.mxu0 0.0
    %240 = vmatprep.subr.mxu0 0.0
    %241 = vmatpush1.msra.mxu0 0.0
    %242 = vmatprep.subr.mxu0 0.0
    %243 = vmatpush1.msra.mxu0 0.0
    %244 = vmatprep.subr.mxu0 0.0
    %245 = vmatpush1.msra.mxu0 0.0
    %246 = vmatprep.subr.mxu0 0.0
    %247 = vmatpush1.msra.mxu0 0.0
    %248 = vmatprep.subr.mxu0 0.0
    %249 = vmatpush1.msra.mxu0 0.0
    %250 = vmatprep.subr.mxu0 0.0
    %251 = vmatpush1.msra.mxu0 0.0
    %252 = vmatprep.subr.mxu0 0.0
    %253 = vmatpush1.msra.mxu0 0.0
    %254 = vmatprep.subr.mxu0 0.0
    %255 = vmatpush1.msra.mxu0 0.0
    %256 = vmatprep.subr.mxu0 0.0
    %257 = vmatpush1.msra.mxu0 0.0
    %258 = vmatprep.subr.mxu0 0.0
    %259 = vmatpush1.msra.mxu0 0.0
    %260 = vmatprep.subr.mxu0 0.0
    %261 = vmatpush1.msra.mxu0 0.0
    %262 = vmatprep.subr.mxu0 0.0
    %263 = vmatpush1.msra.mxu0 0.0
    %264 = vmatprep.subr.mxu0 0.0
    %265 = vmatpush1.msra.mxu0 0.0
    %266 = vmatprep.subr.mxu0 0.0
    %267 = vmatpush1.msra.mxu0 0.0
    %268 = vmatprep.subr.mxu0 0.0
    %269 = vmatpush1.msra.mxu0 0.0
    %270 = vmatprep.subr.mxu0 0.0
    %271 = vmatpush1.msra.mxu0 0.0
    %272 = vmatprep.subr.mxu0 0.0
    %273 = vmatpush1.msra.mxu0 0.0
    %274 = vmatprep.subr.mxu0 0.0
    %275 = vmatpush1.msra.mxu0 0.0
    %276 = vmatprep.subr.mxu0 0.0
    %277 = vmatpush1.msra.mxu0 0.0
    %278 = vmatprep.subr.mxu0 0.0
    %279 = vmatpush1.msra.mxu0 0.0
    %280 = vmatprep.subr.mxu0 0.0
    %281 = vmatpush1.msra.mxu0 0.0
    %282 = vmatprep.subr.mxu0 0.0
    %283 = vmatpush1.msra.mxu0 0.0
    %284 = vmatprep.subr.mxu0 0.0
    %285 = vmatpush1.msra.mxu0 0.0
    %286 = vmatprep.subr.mxu0 0.0
    %287 = vmatpush1.msra.mxu0 0.0
    %288 = vmatprep.mubr.f32.mxu0 0.0
    %289 = vmatmul.mubr.f32.gmra.mrb[0].mxu0 %v213
    %v290 = vpop.f32.mrb[0].mxu0
    %v291 = vadd.f32 %v209, %v290
    %v292 = vpop.f32.mrb[0].mxu0
    %293 = vmatprep.mubr.f32.mxu0 0.0
    %294 = vmatmul.mubr.f32.gmra.mrb[0].mxu0 %v216
    %v295 = vpop.f32.mrb[0].mxu0
    %v296 = vadd.f32 %v209, %v295
    %v297 = vpop.f32.mrb[0].mxu0
    %298 = vmatprep.mubr.f32.mxu0 0.0
    %299 = vmatmul.mubr.f32.gmra.mrb[0].mxu0 %v219
    %v300 = vpop.f32.mrb[0].mxu0
    %v301 = vadd.f32 %v209, %v300
    %v302 = vpop.f32.mrb[0].mxu0
    %303 = vmatprep.mubr.f32.mxu0 0.0
    %304 = vmatmul.mubr.f32.gmra.mrb[0].mxu0 %v222
    %v305 = vpop.f32.mrb[0].mxu0
    %v306 = vadd.f32 %v209, %v305
    %v307 = vpop.f32.mrb[0].mxu0
    %308 = vdwg.mxu0
    %v309 = vmax.f32 %v291, 0.0
    %v310 = vmax.f32 %v296, 0.0
    %v311 = vmax.f32 %v301, 0.0
    %v312 = vmax.f32 %v306, 0.0
    %313 = vst [vmem:[#allocation12] sm:$0xff] %v309
    %314 = vst [vmem:[#allocation12 + $0x8] sm:$0xff] %v310
    %315 = vst [vmem:[#allocation12 + $0x10] sm:$0xff] %v311
    %316 = vst [vmem:[#allocation12 + $0x18] sm:$0xff] %v312
    %v317 = vlaneseq
    %v318 = vand.u32 %v317, 127
    %vm319 = vcmp.lt.s32.totalorder %v318, 0
    %v320 = vsub.s32 0, %v318
    %v321 = vsel %vm319, %v320, %v318
    %v322 = vshrl.u32 %v321, 3
    %v323 = vand.u32 %v321, 7
    %v324 = vsub.s32 0, %v323
    %v325 = vsel %vm319, %v324, %v323
    %vm326 = vcmp.ne.s32.totalorder %v325, 0
    %vm327 = vcmp.lt.s32.totalorder %v325, 0
    %vm328 = vmand %vm327, %vm326
    %v329 = vadd.s32 %v325, 8
    %v330 = vsel %vm328, %v329, %v325
    %331 = vrot.lane.b32.xlu0 %v309, 127
    %v332 = vpop.permute.xlu0 %331
    %333 = vrot.lane.b32.xlu0 %v310, 127
    %v334 = vpop.permute.xlu0 %333
    %335 = vrot.lane.b32.xlu0 %v311, 127
    %v336 = vpop.permute.xlu0 %335
    %337 = vrot.lane.b32.xlu0 %v312, 127
    %v338 = vpop.permute.xlu0 %337
    %339 = vrot.lane.b32.xlu0 %v309, 7
    %v340 = vpop.permute.xlu0 %339
    %341 = vrot.lane.b32.xlu0 %v310, 7
    %v342 = vpop.permute.xlu0 %341
    %343 = vrot.lane.b32.xlu0 %v311, 7
    %v344 = vpop.permute.xlu0 %343
    %345 = vrot.lane.b32.xlu0 %v312, 7
    %v346 = vpop.permute.xlu0 %345
    %v347 = vadd.s32 %v330, 1
    %vm348 = vcmp.lt.s32.totalorder %v347, 8
    %v349 = vsel %vm348, %v332, %v340
    %v350 = vsel %vm348, %v334, %v342
    %v351 = vsel %vm348, %v336, %v344
    %v352 = vsel %vm348, %v338, %v346
    %v353 = vmax.f32 %v309, %v349
    %v354 = vmax.f32 %v310, %v350
    %v355 = vmax.f32 %v311, %v351
    %v356 = vmax.f32 %v312, %v352
    %357 = vrot.lane.b32.xlu0 %v353, 126
    %v358 = vpop.permute.xlu0 %357
    %359 = vrot.lane.b32.xlu0 %v354, 126
    %v360 = vpop.permute.xlu0 %359
    %361 = vrot.lane.b32.xlu0 %v355, 126
    %v362 = vpop.permute.xlu0 %361
    %363 = vrot.lane.b32.xlu0 %v356, 126
    %v364 = vpop.permute.xlu0 %363
    %365 = vrot.lane.b32.xlu0 %v353, 6
    %v366 = vpop.permute.xlu0 %365
    %367 = vrot.lane.b32.xlu0 %v354, 6
    %v368 = vpop.permute.xlu0 %367
    %369 = vrot.lane.b32.xlu0 %v355, 6
    %v370 = vpop.permute.xlu0 %369
    %371 = vrot.lane.b32.xlu0 %v356, 6
    %v372 = vpop.permute.xlu0 %371
    %v373 = vadd.s32 %v330, 2
    %vm374 = vcmp.lt.s32.totalorder %v373, 8
    %v375 = vsel %vm374, %v358, %v366
    %v376 = vsel %vm374, %v360, %v368
    %v377 = vsel %vm374, %v362, %v370
    %v378 = vsel %vm374, %v364, %v372
    %v379 = vmax.f32 %v353, %v375
    %v380 = vmax.f32 %v354, %v376
    %v381 = vmax.f32 %v355, %v377
    %v382 = vmax.f32 %v356, %v378
    %383 = vrot.lane.b32.xlu0 %v379, 124
    %v384 = vpop.permute.xlu0 %383
    %385 = vrot.lane.b32.xlu0 %v380, 124
    %v386 = vpop.permute.xlu0 %385
    %387 = vrot.lane.b32.xlu0 %v381, 124
    %v388 = vpop.permute.xlu0 %387
    %389 = vrot.lane.b32.xlu0 %v382, 124
    %v390 = vpop.permute.xlu0 %389
    %391 = vrot.lane.b32.xlu0 %v379, 4
    %v392 = vpop.permute.xlu0 %391
    %393 = vrot.lane.b32.xlu0 %v380, 4
    %v394 = vpop.permute.xlu0 %393
    %395 = vrot.lane.b32.xlu0 %v381, 4
    %v396 = vpop.permute.xlu0 %395
    %397 = vrot.lane.b32.xlu0 %v382, 4
    %v398 = vpop.permute.xlu0 %397
    %v399 = vadd.s32 %v330, 4
    %vm400 = vcmp.lt.s32.totalorder %v399, 8
    %v401 = vsel %vm400, %v384, %v392
    %v402 = vsel %vm400, %v386, %v394
    %v403 = vsel %vm400, %v388, %v396
    %v404 = vsel %vm400, %v390, %v398
    %v405 = vmax.f32 %v379, %v401
    %v406 = vmax.f32 %v380, %v402
    %v407 = vmax.f32 %v381, %v403
    %v408 = vmax.f32 %v382, %v404
    %v409 = vsub.f32 %v309, %v405
    %v410 = vsub.f32 %v310, %v406
    %v411 = vsub.f32 %v311, %v407
    %v412 = vsub.f32 %v312, %v408
    %v413 = vmul.f32 %v409, 1.442695
    %v414 = vpow.pop %v413
    %v415 = vmul.f32 %v410, 1.442695
    %v416 = vpow.pop %v415
    %v417 = vmul.f32 %v411, 1.442695
    %v418 = vpow.pop %v417
    %v419 = vmul.f32 %v412, 1.442695
    %v420 = vpow.pop %v419
    %421 = vrot.lane.b32.xlu0 %v414, 127
    %v422 = vpop.permute.xlu0 %421
    %423 = vrot.lane.b32.xlu0 %v416, 127
    %v424 = vpop.permute.xlu0 %423
    %425 = vrot.lane.b32.xlu0 %v418, 127
    %v426 = vpop.permute.xlu0 %425
    %427 = vrot.lane.b32.xlu0 %v420, 127
    %v428 = vpop.permute.xlu0 %427
    %429 = vrot.lane.b32.xlu0 %v414, 7
    %v430 = vpop.permute.xlu0 %429
    %431 = vrot.lane.b32.xlu0 %v416, 7
    %v432 = vpop.permute.xlu0 %431
    %433 = vrot.lane.b32.xlu0 %v418, 7
    %v434 = vpop.permute.xlu0 %433
    %435 = vrot.lane.b32.xlu0 %v420, 7
    %v436 = vpop.permute.xlu0 %435
    %v437 = vsel %vm348, %v422, %v430
    %v438 = vsel %vm348, %v424, %v432
    %v439 = vsel %vm348, %v426, %v434
    %v440 = vsel %vm348, %v428, %v436
    %v441 = vadd.f32 %v414, %v437
    %v442 = vadd.f32 %v416, %v438
    %v443 = vadd.f32 %v418, %v439
    %v444 = vadd.f32 %v420, %v440
    %445 = vrot.lane.b32.xlu0 %v441, 126
    %v446 = vpop.permute.xlu0 %445
    %447 = vrot.lane.b32.xlu0 %v442, 126
    %v448 = vpop.permute.xlu0 %447
    %449 = vrot.lane.b32.xlu0 %v443, 126
    %v450 = vpop.permute.xlu0 %449
    %451 = vrot.lane.b32.xlu0 %v444, 126
    %v452 = vpop.permute.xlu0 %451
    %453 = vrot.lane.b32.xlu0 %v441, 6
    %v454 = vpop.permute.xlu0 %453
    %455 = vrot.lane.b32.xlu0 %v442, 6
    %v456 = vpop.permute.xlu0 %455
    %457 = vrot.lane.b32.xlu0 %v443, 6
    %v458 = vpop.permute.xlu0 %457
    %459 = vrot.lane.b32.xlu0 %v444, 6
    %v460 = vpop.permute.xlu0 %459
    %v461 = vsel %vm374, %v446, %v454
    %v462 = vsel %vm374, %v448, %v456
    %v463 = vsel %vm374, %v450, %v458
    %v464 = vsel %vm374, %v452, %v460
    %v465 = vadd.f32 %v441, %v461
    %v466 = vadd.f32 %v442, %v462
    %v467 = vadd.f32 %v443, %v463
    %v468 = vadd.f32 %v444, %v464
    %469 = vrot.lane.b32.xlu0 %v465, 124
    %v470 = vpop.permute.xlu0 %469
    %471 = vrot.lane.b32.xlu0 %v466, 124
    %v472 = vpop.permute.xlu0 %471
    %473 = vrot.lane.b32.xlu0 %v467, 124
    %v474 = vpop.permute.xlu0 %473
    %475 = vrot.lane.b32.xlu0 %v468, 124
    %v476 = vpop.permute.xlu0 %475
    %477 = vrot.lane.b32.xlu0 %v465, 4
    %v478 = vpop.permute.xlu0 %477
    %479 = vrot.lane.b32.xlu0 %v466, 4
    %v480 = vpop.permute.xlu0 %479
    %481 = vrot.lane.b32.xlu0 %v467, 4
    %v482 = vpop.permute.xlu0 %481
    %483 = vrot.lane.b32.xlu0 %v468, 4
    %v484 = vpop.permute.xlu0 %483
    %v485 = vsel %vm400, %v470, %v478
    %v486 = vsel %vm400, %v472, %v480
    %v487 = vsel %vm400, %v474, %v482
    %v488 = vsel %vm400, %v476, %v484
    %v489 = vadd.f32 %v465, %v485
    %v490 = vadd.f32 %v466, %v486
    %v491 = vadd.f32 %v467, %v487
    %v492 = vadd.f32 %v468, %v488
    %v493 = vlog2.pop %v489
    %v494 = vmul.f32 %v493, 0.6931472
    %v495 = vlog2.pop %v490
    %v496 = vmul.f32 %v495, 0.6931472
    %v497 = vlog2.pop %v491
    %v498 = vmul.f32 %v497, 0.6931472
    %v499 = vlog2.pop %v492
    %v500 = vmul.f32 %v499, 0.6931472
    %v501 = vsub.f32 %v409, %v494
    %v502 = vsub.f32 %v410, %v496
    %v503 = vsub.f32 %v411, %v498
    %v504 = vsub.f32 %v412, %v500
    %v505 = vld [vmem:[#allocation9] sm:$0xff]
    %v506 = vld [vmem:[#allocation9 + $0x8] sm:$0xff]
    %v507 = vld [vmem:[#allocation9 + $0x10] sm:$0xff]
    %v508 = vld [vmem:[#allocation9 + $0x18] sm:$0xff]
    %v509 = vmul.f32 %v505, %v501
    %v510 = vmul.f32 %v506, %v502
    %v511 = vmul.f32 %v507, %v503
    %v512 = vmul.f32 %v508, %v504
    %v513 = vadd.f32 %v509, %v510
    %v514 = vadd.f32 %v513, %v511
    %v515 = vadd.f32 %v514, %v512
    %v516 = vrot.slane %v515, 4
    %v517 = vadd.f32 %v515, %v516
    %v518 = vrot.slane %v517, 2
    %v519 = vadd.f32 %v517, %v518
    %v520 = vrot.slane %v519, 1
    %v521 = vadd.f32 %v519, %v520
    %v522 = vld [vmem:[%s5] sm:$0x1]
    %v523 = vadd.f32 %v521, %v522
    %524 = vst [vmem:[#allocation11] sm:$0x1] %v523
    // Predicated region
    $region46: #{tpu_custom_call.1} parent=1 // pred_check
      _
    $region47: #{tpu_custom_call.1} parent=1 // pred_check_branch
      %526 = sbr.rel (0) target = $region49
    $region48: #{tpu_custom_call.1} parent=1 // pred_region
      %s528 = ssub.s32 16, 16
      %529 = vsyncadd [#allocation5], %s528
      %s531 = sshll.u32 [#allocation11], 4
      %s532 = int_to_ptr.vmem [resolvable:$true] %s531
      %534 = dma.vmem_to_hbm [thread:$0]  %s532, 16, %s6, [#allocation5]
    $region49: #{tpu_custom_call.1} parent=1 // pred_fallthru
      _
    // Predicated region
    $region50: #{tpu_custom_call.1} parent=1 // pred_check
      _
    $region51: #{tpu_custom_call.1} parent=1 // pred_check_branch
      %536 = sbr.rel (0) target = $region53
    $region52: #{tpu_custom_call.1} parent=1 // pred_region
      %s538 = ssub.s32 512, 512
      %539 = vsyncadd [#allocation13], %s538
      %s540 = sshll.u32 [#allocation12], 4
      %s541 = int_to_ptr.vmem [resolvable:$true] %s540
      %546 = dma.vmem_to_hbm [thread:$0]  %s541, 512, %s7, [#allocation13], 128, 128, 8
    $region53: #{tpu_custom_call.1} parent=1 // pred_fallthru
      _
    // Predicated region
    $region54: #{tpu_custom_call.1} parent=1 // pred_check
      _
    $region55: #{tpu_custom_call.1} parent=1 // pred_check_branch
      %548 = sbr.rel (0) target = $region57
    $region56: #{tpu_custom_call.1} parent=1 // pred_region
      %549 = dma.done [#allocation5], 16
    $region57: #{tpu_custom_call.1} parent=1 // pred_fallthru
      _
    // Predicated region
    $region58: #{tpu_custom_call.1} parent=1 // pred_check
      _
    $region59: #{tpu_custom_call.1} parent=1 // pred_check_branch
      %551 = sbr.rel (0) target = $region61
    $region60: #{tpu_custom_call.1} parent=1 // pred_region
      %552 = dma.done [#allocation13], 512
    $region61: #{tpu_custom_call.1} parent=1 // pred_fallthru
      _
    %553 = vsyncpa [#allocation4], 1
    %554 = vsyncpa [#allocation7], 1
    %555 = vsyncpa [#allocation10], 1
    %556 = vsyncpa [#allocation5], 1
    %557 = vsyncpa [#allocation13], 1

</llo_original>
